<compile_context>
chip_gen: v6e
topology: v6e:2x2x1
jax: 0.10.0
libtpu: 0.0.40
codegen_flags: <defaults>
</compile_context>

<pallas_src>
import jax
import jax.numpy as jnp
from jax.experimental import pallas as pl
from jax.experimental.pallas import tpu as pltpu

NUM_SIGNALS = 64   # number of signals in the synthetic feature "file"
NUM_FEATS = 22     # catch-22 features per signal
LANE = 128         # lane-dense padded feature width (multiple of 128)
SUBLANE = 8        # sublane tile for the batch dim


def _gather_kernel(idx_ref, table_ref, out_ref):
    # idx_ref   : VMEM int32[B_pad, 1]   (clamped lookup indices, lane-broadcastable)
    # table_ref : VMEM f32[N, LANE]      (whole padded table, resident in VMEM)
    # out_ref   : VMEM f32[B_pad, LANE]  (one dense output slab)
    b_pad = out_ref.shape[0]
    n = table_ref.shape[0]
    # Gather-as-matmul: one-hot rows selected on the MXU in a single pass.
    col_ids = jax.lax.broadcasted_iota(jnp.int32, (b_pad, n), 1)
    one_hot = (col_ids == idx_ref[...]).astype(jnp.float32)
    out_ref[...] = jnp.dot(one_hot, table_ref[...],
                           preferred_element_type=jnp.float32)


@jax.jit
def catch22_lookup(table_padded, indices):
    """Batched equivalent of Catch22.forward: returns (B, NUM_FEATS) float32.

    table_padded : (NUM_SIGNALS, LANE) float32 with features in [:, :NUM_FEATS]
    indices      : (B,) integer lookup indices

    NOTE: at this table size a plain XLA gather (jnp.take) is equally fast;
    the Pallas path is kept so the lookup can fuse into a larger pipeline.
    """
    n, f = table_padded.shape
    b = indices.shape[0]
    b_pad = max(SUBLANE, ((b + SUBLANE - 1) // SUBLANE) * SUBLANE)

    # Clamp so an out-of-range index cannot read adjacent/stale memory
    # (semantic divergence from the dict KeyError in the torch module).
    idx = jnp.clip(indices.astype(jnp.int32), 0, n - 1)
    idx_padded = jnp.zeros((b_pad, 1), dtype=jnp.int32).at[:b, 0].set(idx)

    out_padded = pl.pallas_call(
        _gather_kernel,
        out_shape=jax.ShapeDtypeStruct((b_pad, f), jnp.float32),
        grid_spec=pl.GridSpec(
            grid=(1,),
            in_specs=[
                # Full-array blocks: one bulk DMA each, no per-row pipelining.
                pl.BlockSpec((b_pad, 1), lambda i: (0, 0)),
                pl.BlockSpec((n, f), lambda i: (0, 0)),
            ],
            out_specs=pl.BlockSpec((b_pad, f), lambda i: (0, 0)),
        ),
        compiler_params=pltpu.CompilerParams(
            dimension_semantics=("arbitrary",),
        ),
    )(idx_padded, table_padded)

    # Strip the sublane (batch) and lane (feature) padding.
    return out_padded[:b, :NUM_FEATS]


def make_feature_table(key):
    """One-time 'module init': build and lane-pad the feature table."""
    # TODO(synk): real module loads precomputed catch-22 features from an .npz
    # checkpoint; here the table is synthesized deterministically.
    table = jax.random.normal(key, (NUM_SIGNALS, NUM_FEATS), dtype=jnp.float32)
    table_padded = jnp.zeros((NUM_SIGNALS, LANE), dtype=jnp.float32)
    table_padded = table_padded.at[:, :NUM_FEATS].set(table)
    return table, table_padded


if __name__ == "__main__":
    key = jax.random.PRNGKey(0)
    table, table_padded = make_feature_table(key)
    table_padded = jax.device_put(table_padded)

    # Batched lookup (non-multiple-of-8 batch exercises the padding path).
    indices = jnp.array([7, 0, 63, 3, 11, 42, 7, 20, 31, 2], dtype=jnp.int32)
    out = catch22_lookup(table_padded, indices)
    out = jax.block_until_ready(out)

    expected = table[indices, :]
    assert out.shape == (indices.shape[0], NUM_FEATS), out.shape
    assert out.dtype == jnp.float32, out.dtype
    assert bool(jnp.allclose(out, expected)), "batched lookup mismatch"

    # Single-index forward, matching Catch22.forward(index) -> (1, 22)
    single = catch22_lookup(table_padded, jnp.array([5], dtype=jnp.int32))
    single = jax.block_until_ready(single)
    assert single.shape == (1, NUM_FEATS), single.shape
    assert bool(jnp.allclose(single, table[5][None, :])), "single lookup mismatch"

    print("KERNEL_OK")
</pallas_src>

<mosaic_0001>
module attributes {stable_mosaic.version = 11 : i64} {
  func.func @_gather_kernel(%arg0: i32, %arg1: memref<16x1xi32, #tpu.memory_space<vmem>>, %arg2: memref<64x128xf32, #tpu.memory_space<vmem>>, %arg3: memref<16x128xf32, #tpu.memory_space<vmem>>) attributes {dimension_semantics = [#tpu.dimension_semantics<arbitrary>], iteration_bounds = array<i64: 1>, scalar_prefetch = 0 : i64, scratch_operands = 0 : i64, tpu.core_type = #tpu.core_type<tc>, window_params = [{pipeline_mode = #tpu.pipeline_mode<synchronous>, transform_indices = @transform_0, window_bounds = array<i64: 16, 1>}, {pipeline_mode = #tpu.pipeline_mode<synchronous>, transform_indices = @transform_1, window_bounds = array<i64: 64, 128>}, {pipeline_mode = #tpu.pipeline_mode<synchronous>, transform_indices = @transform_2, window_bounds = array<i64: 16, 128>}]} {
    %0 = tpu.iota {dimensions = array<i32: 1>} : vector<16x64xi32>
    %c0 = arith.constant 0 : index
    %c0_0 = arith.constant 0 : index
    %1 = vector.load %arg1[%c0, %c0_0] : memref<16x1xi32, #tpu.memory_space<vmem>>, vector<16x1xi32>
    %2 = vector.broadcast %1 : vector<16x1xi32> to vector<16x64xi32>
    %3 = arith.cmpi eq, %0, %2 : vector<16x64xi32>
    %4 = arith.extui %3 : vector<16x64xi1> to vector<16x64xi32>
    %5 = arith.sitofp %4 : vector<16x64xi32> to vector<16x64xf32>
    %c0_1 = arith.constant 0 : index
    %c0_2 = arith.constant 0 : index
    %6 = vector.load %arg2[%c0_1, %c0_2] : memref<64x128xf32, #tpu.memory_space<vmem>>, vector<64x128xf32>
    %cst = arith.constant dense<0.000000e+00> : vector<16x128xf32>
    %7 = tpu.matmul %5, %6, %cst {dimension_numbers = #tpu.dot_dimension_numbers<[1], [0], [0], [1], [0, 0, 1, 1], [], []>} : vector<16x64xf32>, vector<64x128xf32>, vector<16x128xf32> -> vector<16x128xf32>
    %c0_3 = arith.constant 0 : index
    %c0_4 = arith.constant 0 : index
    %8 = vector.load %arg3[%c0_3, %c0_4] : memref<16x128xf32, #tpu.memory_space<vmem>>, vector<16x128xf32>
    tpu.vector_store %arg3[%c0_3, %c0_4], %7 {strides = array<i32>} : memref<16x128xf32, #tpu.memory_space<vmem>>, vector<16x128xf32>,
    return
  }
  func.func @transform_0(%arg0: i32) -> (i32, i32) {
    %c0_i32 = arith.constant 0 : i32
    %c0_i32_0 = arith.constant 0 : i32
    %c0_i32_1 = arith.constant 0 : i32
    return %c0_i32, %c0_i32_0 : i32, i32
  }
  func.func @transform_1(%arg0: i32) -> (i32, i32) {
    %c0_i32 = arith.constant 0 : i32
    %c0_i32_0 = arith.constant 0 : i32
    %c0_i32_1 = arith.constant 0 : i32
    return %c0_i32, %c0_i32_0 : i32, i32
  }
  func.func @transform_2(%arg0: i32) -> (i32, i32) {
    %c0_i32 = arith.constant 0 : i32
    %c0_i32_0 = arith.constant 0 : i32
    %c0_i32_1 = arith.constant 0 : i32
    return %c0_i32, %c0_i32_0 : i32, i32
  }
}

</mosaic_0001>

<llo_original>
// kernel: catch22_lookup.1
$region0: #{catch22_lookup.1}
  #allocation0 [shape = 'u32[]', space=smem, size = 0x4, offset = 0x4, fixed_abs, tag = 'smem constant byte address 0x4 - core index']
  #allocation1 [shape = 'u32[144,128]{1,0:T(1,128)}', space=vmem, size = 0x12000, scoped, tag = 'internal scratch']
  %s0 = inlined_call_operand.vmem [shape: s32[16,1], index: 0, kind: input, shape index: {}]
  %s1 = inlined_call_operand.hbm [shape: f32[64,128], index: 1, kind: input, shape index: {}]
  %s2 = inlined_call_operand.hbm [shape: f32[16,128], index: 2, kind: output, shape index: {}]
  %s3 = sld [smem:[#allocation0]]
  $region22: #{catch22_lookup.1} parent=0
    _
  %s5 = ssub.s32 1, %s3
  %s6 = scalar_select 0, %s5, %s3
  $region1: #{catch22_lookup.1} parent=0
    #allocation2 [shape = 'u8[32768]{0}', space=vmem, size = 0x8000, scoped, tag = 'input window, operand 1, single buffered']
    #allocation3 [shape = 's32[1]{0}', space=sflag, size = 0x4, scoped, tag = 'scoped memory for catch22_lookup.1']
    #allocation4 [shape = 's32[1]{0}', space=sflag, size = 0x4, scoped, tag = 'scoped memory for catch22_lookup.1']
    #allocation5 [shape = 'u8[8192]{0}', space=vmem, size = 0x2000, scoped, tag = 'output window, operand 0, single buffered']
    %7 = vsyncpa [#allocation3], 0
    %8 = vsyncpa [#allocation4], 0
    // Predicated region
    $region2: #{catch22_lookup.1} parent=1 // pred_check
      _
    $region3: #{catch22_lookup.1} parent=1 // pred_check_branch
      %10 = sbr.rel (0) target = $region5
    $region4: #{catch22_lookup.1} parent=1 // pred_region
      _
    $region5: #{catch22_lookup.1} parent=1 // pred_fallthru
      _
    // Predicated region
    $region6: #{catch22_lookup.1} parent=1 // pred_check
      _
    $region7: #{catch22_lookup.1} parent=1 // pred_check_branch
      %12 = sbr.rel (0) target = $region9
    $region8: #{catch22_lookup.1} parent=1 // pred_region
      %s14 = ssub.s32 1024, 1024
      %15 = vsyncadd [#allocation3], %s14
      %s16 = sshll.u32 [#allocation2], 4
      %s17 = int_to_ptr.vmem [resolvable:$true] %s16
      %22 = dma.hbm_to_vmem [thread:$0]  %s1, 1024, %s17, [#allocation3], 128, 128, 8
    $region9: #{catch22_lookup.1} parent=1 // pred_fallthru
      _
    // Predicated region
    $region10: #{catch22_lookup.1} parent=1 // pred_check
      _
    $region11: #{catch22_lookup.1} parent=1 // pred_check_branch
      %24 = sbr.rel (0) target = $region13
    $region12: #{catch22_lookup.1} parent=1 // pred_region
      %25 = dma.done [#allocation3], 1024
    $region13: #{catch22_lookup.1} parent=1 // pred_fallthru
      _
    %v26 = vlaneseq
    %v27 = vand.u32 %v26, 127
    %v28 = vld [vmem:[%s0] sm:$0xff]
    %v29 = vld [vmem:[%s0 + $0x8] sm:$0xff]
    %30 = vset.pattern.permute.xlu0 0
    %31 = vperm.xlu0 %30, %v28
    %v32 = vpop.permute.xlu0 %31
    %33 = vset.pattern.permute.xlu0 0
    %34 = vperm.xlu0 %33, %v29
    %v35 = vpop.permute.xlu0 %34
    %vm36 = vcmp.eq.s32.totalorder %v27, %v32
    %vm37 = vcmp.eq.s32.totalorder %v27, %v35
    %v38 = vsel %vm36, 1, 0
    %v39 = vsel %vm37, 1, 0
    %v40 = vcvt.s32.f32 %v38
    %v41 = vcvt.s32.f32 %v39
    %v42 = vld [vmem:[#allocation2] sm:$0xff]
    %v43 = vld [vmem:[#allocation2 + $0x8] sm:$0xff]
    %v44 = vld [vmem:[#allocation2 + $0x10] sm:$0xff]
    %v45 = vld [vmem:[#allocation2 + $0x18] sm:$0xff]
    %v46 = vld [vmem:[#allocation2 + $0x20] sm:$0xff]
    %v47 = vld [vmem:[#allocation2 + $0x28] sm:$0xff]
    %v48 = vld [vmem:[#allocation2 + $0x30] sm:$0xff]
    %v49 = vld [vmem:[#allocation2 + $0x38] sm:$0xff]
    %vm50 = vcmask 523264
    %v52 = vsel %vm50, %v40, 0
    %v55 = vsel %vm50, %v41, 0
    %57 = vmatprep.subr.mxu0 0.0
    %58 = vmatpush1.msra.mxu0 0.0
    %59 = vmatprep.subr.mxu0 0.0
    %60 = vmatpush1.msra.mxu0 0.0
    %61 = vmatprep.subr.mxu0 0.0
    %62 = vmatpush1.msra.mxu0 0.0
    %63 = vmatprep.subr.mxu0 0.0
    %64 = vmatpush1.msra.mxu0 0.0
    %65 = vmatprep.subr.mxu0 0.0
    %66 = vmatpush1.msra.mxu0 0.0
    %67 = vmatprep.subr.mxu0 0.0
    %68 = vmatpush1.msra.mxu0 0.0
    %69 = vmatprep.subr.mxu0 0.0
    %70 = vmatpush1.msra.mxu0 0.0
    %71 = vmatprep.subr.mxu0 0.0
    %72 = vmatpush1.msra.mxu0 0.0
    %73 = vmatprep.subr.mxu0 0.0
    %74 = vmatpush1.msra.mxu0 %v49
    %75 = vmatprep.subr.mxu0 0.0
    %76 = vmatpush1.msra.mxu0 %v48
    %77 = vmatprep.subr.mxu0 0.0
    %78 = vmatpush1.msra.mxu0 %v47
    %79 = vmatprep.subr.mxu0 0.0
    %80 = vmatpush1.msra.mxu0 %v46
    %81 = vmatprep.subr.mxu0 0.0
    %82 = vmatpush1.msra.mxu0 %v45
    %83 = vmatprep.subr.mxu0 0.0
    %84 = vmatpush1.msra.mxu0 %v44
    %85 = vmatprep.subr.mxu0 0.0
    %86 = vmatpush1.msra.mxu0 %v43
    %87 = vmatprep.subr.mxu0 0.0
    %88 = vmatpush1.msra.mxu0 %v42
    %89 = vmatprep.subr.mxu0 0.0
    %90 = vmatpush2.msra.mxu0 0.0
    %91 = vmatprep.subr.mxu0 0.0
    %92 = vmatpush2.msra.mxu0 0.0
    %93 = vmatprep.subr.mxu0 0.0
    %94 = vmatpush2.msra.mxu0 0.0
    %95 = vmatprep.subr.mxu0 0.0
    %96 = vmatpush2.msra.mxu0 0.0
    %97 = vmatprep.subr.mxu0 0.0
    %98 = vmatpush2.msra.mxu0 0.0
    %99 = vmatprep.subr.mxu0 0.0
    %100 = vmatpush2.msra.mxu0 0.0
    %101 = vmatprep.subr.mxu0 0.0
    %102 = vmatpush2.msra.mxu0 0.0
    %103 = vmatprep.subr.mxu0 0.0
    %104 = vmatpush2.msra.mxu0 0.0
    %105 = vmatprep.subr.mxu0 0.0
    %106 = vmatpush2.msra.mxu0 0.0
    %107 = vmatprep.subr.mxu0 0.0
    %108 = vmatpush2.msra.mxu0 0.0
    %109 = vmatprep.subr.mxu0 0.0
    %110 = vmatpush2.msra.mxu0 0.0
    %111 = vmatprep.subr.mxu0 0.0
    %112 = vmatpush2.msra.mxu0 0.0
    %113 = vmatprep.subr.mxu0 0.0
    %114 = vmatpush2.msra.mxu0 0.0
    %115 = vmatprep.subr.mxu0 0.0
    %116 = vmatpush2.msra.mxu0 0.0
    %117 = vmatprep.subr.mxu0 0.0
    %118 = vmatpush2.msra.mxu0 0.0
    %119 = vmatprep.subr.mxu0 0.0
    %120 = vmatpush2.msra.mxu0 0.0
    %121 = vmatprep.mubr.f32.mxu0 0.0
    %122 = vmatmul.mubr.f32.gmra.mxu0 %v52
    %v123 = vpop.f32.mrf.mxu0
    %v124 = vadd.f32 0.0, %v123
    %v125 = vpop.f32.mrf.mxu0
    %126 = vmatprep.mubr.f32.mxu0 0.0
    %127 = vmatmul.mubr.f32.gmra.mxu0 %v55
    %v128 = vpop.f32.mrf.mxu0
    %v129 = vadd.f32 0.0, %v128
    %v130 = vpop.f32.mrf.mxu0
    %131 = vdwg.mxu0
    %132 = vst [vmem:[#allocation5] sm:$0xff] %v124
    %133 = vst [vmem:[#allocation5 + $0x8] sm:$0xff] %v129
    // Predicated region
    $region14: #{catch22_lookup.1} parent=1 // pred_check
      _
    $region15: #{catch22_lookup.1} parent=1 // pred_check_branch
      %135 = sbr.rel (0) target = $region17
    $region16: #{catch22_lookup.1} parent=1 // pred_region
      %s137 = ssub.s32 256, 256
      %138 = vsyncadd [#allocation4], %s137
      %s139 = sshll.u32 [#allocation5], 4
      %s140 = int_to_ptr.vmem [resolvable:$true] %s139
      %145 = dma.vmem_to_hbm [thread:$0]  %s140, 256, %s2, [#allocation4], 128, 128, 8
    $region17: #{catch22_lookup.1} parent=1 // pred_fallthru
      _
    // Predicated region
    $region18: #{catch22_lookup.1} parent=1 // pred_check
      _
    $region19: #{catch22_lookup.1} parent=1 // pred_check_branch
      %147 = sbr.rel (0) target = $region21
    $region20: #{catch22_lookup.1} parent=1 // pred_region
      %148 = dma.done [#allocation4], 256
    $region21: #{catch22_lookup.1} parent=1 // pred_fallthru
      _
    %149 = vsyncpa [#allocation3], 1
    %150 = vsyncpa [#allocation4], 1

</llo_original>
